<compile_context>
chip_gen: v6e
topology: v6e:2x2x1
jax: 0.10.0
libtpu: 0.0.40
codegen_flags: <defaults>
</compile_context>

<pallas_src>
import jax
import jax.numpy as jnp
from jax.experimental import pallas as pl
from jax.experimental.pallas import tpu as pltpu

H1 = 64
H2 = 32
LEAKY_SLOPE = 0.01  # PyTorch LeakyReLU default negative_slope


def _leaky_relu(x):
    return jnp.where(x >= 0, x, LEAKY_SLOPE * x)


def critic_kernel(x_ref, w1_ref, b1_ref, w2_ref, b2_ref, w3_ref, b3_ref, o_ref):
    # x_ref: (D, TB) with batch on lanes; weights are pre-transposed (out, in).
    # Layer 1: (H1, D) @ (D, TB) -> (H1, TB), + bias (lane broadcast), LeakyReLU.
    h1 = jnp.dot(w1_ref[...], x_ref[...], preferred_element_type=jnp.float32)
    h1 = _leaky_relu(h1 + b1_ref[...])
    # Layer 2: (H2, H1) @ (H1, TB) -> (H2, TB).
    h2 = jnp.dot(w2_ref[...], h1, preferred_element_type=jnp.float32)
    h2 = _leaky_relu(h2 + b2_ref[...])
    # Layer 3: (1, H2) @ (H2, TB) -> (1, TB); N = TB lane-dense, so the MXU
    # pushes are useful here (unlike the old N=1 formulation).
    q = jnp.dot(w3_ref[...], h2, preferred_element_type=jnp.float32) + b3_ref[...]
    o_ref[...] = q.astype(o_ref.dtype)


def _round_up(x, m):
    return (x + m - 1) // m * m


def _padded_bytes_2d(rows, cols, itemsize=4):
    # Physical (sublane, lane) tiling: rows -> multiple of 8, cols -> 128.
    return itemsize * _round_up(rows, 8) * _round_up(cols, 128)


def _choose_tb(B, tile_b):
    """Lane-aligned batch tile; >=2 grid steps whenever B > 128 (v7x megacore)."""
    if B <= 128:
        return B                      # single full-dim block
    half = (B // 2) // 128 * 128      # aim for at least two grid steps
    cap = max(128, (tile_b // 128) * 128)
    return max(128, min(cap, half if half > 0 else 128))


def critic_forward(state, action, params, *, tile_b=2048):
    """state: (B, state_dim) f32, action: (B, action_dim) f32 -> Q: (B, 1) f32."""
    B, state_dim = state.shape
    action_dim = action.shape[1]
    D = state_dim + action_dim

    # Transpose weights once in the wrapper (tiny); biases become column vectors.
    w1T = params["w1"].T                  # (H1, D)
    w2T = params["w2"].T                  # (H2, H1)
    w3T = params["w3"].T                  # (1, H2)
    b1c = params["b1"].reshape(H1, 1)
    b2c = params["b2"].reshape(H2, 1)
    b3c = params["b3"].reshape(1, 1)

    # Lane-dense packed input: fuse the concat outside the kernel and put the
    # batch on the lane axis.  Single (D, B) DMA per tile, no 8-32x lane padding.
    xT = jnp.concatenate((state, action), axis=1).T   # (D, B)

    TB = _choose_tb(B, tile_b)
    grid = (pl.cdiv(B, TB),)

    # Weights/biases: full-array blocks at a constant block index -> resident.
    const = lambda a: pl.BlockSpec(a.shape, lambda i: (0,) * a.ndim)

    weight_like = (w1T, b1c, w2T, b2c, w3T, b3c)
    cost = pl.CostEstimate(
        flops=2 * B * (D * H1 + H1 * H2 + H2 * 1),
        transcendentals=0,
        bytes_accessed=(_padded_bytes_2d(D, B)        # X^T in
                        + _padded_bytes_2d(1, B)      # Q^T out
                        + sum(_padded_bytes_2d(*w.shape) for w in weight_like)),
    )

    out = pl.pallas_call(
        critic_kernel,
        out_shape=jax.ShapeDtypeStruct((1, B), jnp.float32),
        grid_spec=pltpu.PrefetchScalarGridSpec(
            num_scalar_prefetch=0,
            grid=grid,
            in_specs=[
                pl.BlockSpec((D, TB), lambda i: (0, i)),
                const(w1T), const(b1c),
                const(w2T), const(b2c),
                const(w3T), const(b3c),
            ],
            out_specs=pl.BlockSpec((1, TB), lambda i: (0, i)),
        ),
        compiler_params=pltpu.CompilerParams(
            dimension_semantics=("parallel",)),
        cost_estimate=cost,
    )(xT, w1T, b1c, w2T, b2c, w3T, b3c)

    return out.reshape(B, 1)


def init_critic_params(key, state_dim, action_dim):
    """PyTorch-style uniform(-1/sqrt(fan_in), 1/sqrt(fan_in)) init for the Critic."""
    ks = jax.random.split(key, 6)

    def lin(kw, kb, fan_in, fan_out):
        bound = 1.0 / float(fan_in) ** 0.5
        w = jax.random.uniform(kw, (fan_in, fan_out), jnp.float32, -bound, bound)
        b = jax.random.uniform(kb, (1, fan_out), jnp.float32, -bound, bound)
        return w, b

    w1, b1 = lin(ks[0], ks[1], state_dim + action_dim, H1)
    w2, b2 = lin(ks[2], ks[3], H1, H2)
    w3, b3 = lin(ks[4], ks[5], H2, 1)
    return dict(w1=w1, b1=b1, w2=w2, b2=b2, w3=w3, b3=b3)


def critic_reference(state, action, params):
    """Plain-JAX reference of Critic.forward for correctness checks."""
    x = jnp.concatenate((state, action), axis=1)
    h = x @ params["w1"] + params["b1"]
    h = jnp.where(h >= 0, h, LEAKY_SLOPE * h)
    h = h @ params["w2"] + params["b2"]
    h = jnp.where(h >= 0, h, LEAKY_SLOPE * h)
    return h @ params["w3"] + params["b3"]


if __name__ == "__main__":
    key = jax.random.PRNGKey(0)
    state_dim = 16
    action_dim = 4

    k_param, k_s, k_a, k_s2, k_a2 = jax.random.split(key, 5)
    params = init_critic_params(k_param, state_dim, action_dim)

    # Small check (single grid step, full-dim lane block).
    batch = 8
    state = jax.random.normal(k_s, (batch, state_dim), jnp.float32)
    action = jax.random.normal(k_a, (batch, action_dim), jnp.float32)
    out = jax.block_until_ready(critic_forward(state, action, params))
    ref = critic_reference(state, action, params)
    assert out.shape == (batch, 1)
    assert jnp.allclose(out, ref, atol=1e-4, rtol=1e-4)

    # Pipelined check: >=2 lane-aligned grid steps with VMEM-resident weights.
    batch2 = 512
    state2 = jax.random.normal(k_s2, (batch2, state_dim), jnp.float32)
    action2 = jax.random.normal(k_a2, (batch2, action_dim), jnp.float32)
    out2 = jax.block_until_ready(critic_forward(state2, action2, params))
    ref2 = critic_reference(state2, action2, params)
    assert out2.shape == (batch2, 1)
    assert jnp.allclose(out2, ref2, atol=1e-4, rtol=1e-4)

    print("KERNEL_OK")
</pallas_src>

<mosaic_0001>
module attributes {stable_mosaic.version = 11 : i64} {
  func.func @critic_kernel(%arg0: i32, %arg1: memref<20x8xf32, #tpu.memory_space<vmem>>, %arg2: memref<64x20xf32, #tpu.memory_space<vmem>>, %arg3: memref<64x1xf32, #tpu.memory_space<vmem>>, %arg4: memref<32x64xf32, #tpu.memory_space<vmem>>, %arg5: memref<32x1xf32, #tpu.memory_space<vmem>>, %arg6: memref<1x32xf32, #tpu.memory_space<vmem>>, %arg7: memref<1x1xf32, #tpu.memory_space<vmem>>, %arg8: memref<1x8xf32, #tpu.memory_space<vmem>>) attributes {dimension_semantics = [#tpu.dimension_semantics<parallel>], iteration_bounds = array<i64: 1>, scalar_prefetch = 0 : i64, scratch_operands = 0 : i64, tpu.core_type = #tpu.core_type<tc>, window_params = [{transform_indices = @transform_0, window_bounds = array<i64: 20, 8>}, {pipeline_mode = #tpu.pipeline_mode<synchronous>, transform_indices = @transform_1, window_bounds = array<i64: 64, 20>}, {pipeline_mode = #tpu.pipeline_mode<synchronous>, transform_indices = @transform_2, window_bounds = array<i64: 64, 1>}, {pipeline_mode = #tpu.pipeline_mode<synchronous>, transform_indices = @transform_3, window_bounds = array<i64: 32, 64>}, {pipeline_mode = #tpu.pipeline_mode<synchronous>, transform_indices = @transform_4, window_bounds = array<i64: 32, 1>}, {pipeline_mode = #tpu.pipeline_mode<synchronous>, transform_indices = @transform_5, window_bounds = array<i64: 1, 32>}, {pipeline_mode = #tpu.pipeline_mode<synchronous>, transform_indices = @transform_6, window_bounds = array<i64: 1, 1>}, {transform_indices = @transform_7, window_bounds = array<i64: 1, 8>}]} {
    %c0 = arith.constant 0 : index
    %c0_0 = arith.constant 0 : index
    %0 = vector.load %arg2[%c0, %c0_0] : memref<64x20xf32, #tpu.memory_space<vmem>>, vector<64x20xf32>
    %c0_1 = arith.constant 0 : index
    %c0_2 = arith.constant 0 : index
    %1 = vector.load %arg1[%c0_1, %c0_2] : memref<20x8xf32, #tpu.memory_space<vmem>>, vector<20x8xf32>
    %cst = arith.constant dense<0.000000e+00> : vector<64x8xf32>
    %2 = tpu.matmul %0, %1, %cst {dimension_numbers = #tpu.dot_dimension_numbers<[1], [0], [0], [1], [0, 0, 1, 1], [], []>} : vector<64x20xf32>, vector<20x8xf32>, vector<64x8xf32> -> vector<64x8xf32>
    %c0_3 = arith.constant 0 : index
    %c0_4 = arith.constant 0 : index
    %3 = vector.load %arg3[%c0_3, %c0_4] : memref<64x1xf32, #tpu.memory_space<vmem>>, vector<64x1xf32>
    %4 = vector.broadcast %3 : vector<64x1xf32> to vector<64x8xf32>
    %5 = arith.addf %2, %4 : vector<64x8xf32>
    %cst_5 = arith.constant 0.000000e+00 : f32
    %6 = vector.broadcast %cst_5 : f32 to vector<64x8xf32>
    %7 = arith.cmpf oge, %5, %6 : vector<64x8xf32>
    %cst_6 = arith.constant 0.00999999977 : f32
    %8 = vector.broadcast %cst_6 : f32 to vector<64x8xf32>
    %9 = arith.mulf %8, %5 : vector<64x8xf32>
    %10 = arith.select %7, %5, %9 : vector<64x8xi1>, vector<64x8xf32>
    %c0_7 = arith.constant 0 : index
    %c0_8 = arith.constant 0 : index
    %11 = vector.load %arg4[%c0_7, %c0_8] : memref<32x64xf32, #tpu.memory_space<vmem>>, vector<32x64xf32>
    %cst_9 = arith.constant dense<0.000000e+00> : vector<32x8xf32>
    %12 = tpu.matmul %11, %10, %cst_9 {dimension_numbers = #tpu.dot_dimension_numbers<[1], [0], [0], [1], [0, 0, 1, 1], [], []>} : vector<32x64xf32>, vector<64x8xf32>, vector<32x8xf32> -> vector<32x8xf32>
    %c0_10 = arith.constant 0 : index
    %c0_11 = arith.constant 0 : index
    %13 = vector.load %arg5[%c0_10, %c0_11] : memref<32x1xf32, #tpu.memory_space<vmem>>, vector<32x1xf32>
    %14 = vector.broadcast %13 : vector<32x1xf32> to vector<32x8xf32>
    %15 = arith.addf %12, %14 : vector<32x8xf32>
    %cst_12 = arith.constant 0.000000e+00 : f32
    %16 = vector.broadcast %cst_12 : f32 to vector<32x8xf32>
    %17 = arith.cmpf oge, %15, %16 : vector<32x8xf32>
    %cst_13 = arith.constant 0.00999999977 : f32
    %18 = vector.broadcast %cst_13 : f32 to vector<32x8xf32>
    %19 = arith.mulf %18, %15 : vector<32x8xf32>
    %20 = arith.select %17, %15, %19 : vector<32x8xi1>, vector<32x8xf32>
    %c0_14 = arith.constant 0 : index
    %c0_15 = arith.constant 0 : index
    %21 = vector.load %arg6[%c0_14, %c0_15] : memref<1x32xf32, #tpu.memory_space<vmem>>, vector<1x32xf32>
    %cst_16 = arith.constant dense<0.000000e+00> : vector<1x8xf32>
    %22 = tpu.matmul %21, %20, %cst_16 {dimension_numbers = #tpu.dot_dimension_numbers<[1], [0], [0], [1], [0, 0, 1, 1], [], []>} : vector<1x32xf32>, vector<32x8xf32>, vector<1x8xf32> -> vector<1x8xf32>
    %c0_17 = arith.constant 0 : index
    %c0_18 = arith.constant 0 : index
    %23 = vector.load %arg7[%c0_17, %c0_18] : memref<1x1xf32, #tpu.memory_space<vmem>>, vector<1x1xf32>
    %24 = vector.broadcast %23 : vector<1x1xf32> to vector<1x8xf32>
    %25 = arith.addf %22, %24 : vector<1x8xf32>
    %c0_19 = arith.constant 0 : index
    %c0_20 = arith.constant 0 : index
    %26 = vector.load %arg8[%c0_19, %c0_20] : memref<1x8xf32, #tpu.memory_space<vmem>>, vector<1x8xf32>
    tpu.vector_store %arg8[%c0_19, %c0_20], %25 {strides = array<i32>} : memref<1x8xf32, #tpu.memory_space<vmem>>, vector<1x8xf32>,
    return
  }
  func.func @transform_0(%arg0: i32) -> (i32, i32) {
    %c0_i32 = arith.constant 0 : i32
    %c0_i32_0 = arith.constant 0 : i32
    return %c0_i32, %arg0 : i32, i32
  }
  func.func @transform_1(%arg0: i32) -> (i32, i32) {
    %c0_i32 = arith.constant 0 : i32
    %c0_i32_0 = arith.constant 0 : i32
    %c0_i32_1 = arith.constant 0 : i32
    return %c0_i32, %c0_i32_0 : i32, i32
  }
  func.func @transform_2(%arg0: i32) -> (i32, i32) {
    %c0_i32 = arith.constant 0 : i32
    %c0_i32_0 = arith.constant 0 : i32
    %c0_i32_1 = arith.constant 0 : i32
    return %c0_i32, %c0_i32_0 : i32, i32
  }
  func.func @transform_3(%arg0: i32) -> (i32, i32) {
    %c0_i32 = arith.constant 0 : i32
    %c0_i32_0 = arith.constant 0 : i32
    %c0_i32_1 = arith.constant 0 : i32
    return %c0_i32, %c0_i32_0 : i32, i32
  }
  func.func @transform_4(%arg0: i32) -> (i32, i32) {
    %c0_i32 = arith.constant 0 : i32
    %c0_i32_0 = arith.constant 0 : i32
    %c0_i32_1 = arith.constant 0 : i32
    return %c0_i32, %c0_i32_0 : i32, i32
  }
  func.func @transform_5(%arg0: i32) -> (i32, i32) {
    %c0_i32 = arith.constant 0 : i32
    %c0_i32_0 = arith.constant 0 : i32
    %c0_i32_1 = arith.constant 0 : i32
    return %c0_i32, %c0_i32_0 : i32, i32
  }
  func.func @transform_6(%arg0: i32) -> (i32, i32) {
    %c0_i32 = arith.constant 0 : i32
    %c0_i32_0 = arith.constant 0 : i32
    %c0_i32_1 = arith.constant 0 : i32
    return %c0_i32, %c0_i32_0 : i32, i32
  }
  func.func @transform_7(%arg0: i32) -> (i32, i32) {
    %c0_i32 = arith.constant 0 : i32
    %c0_i32_0 = arith.constant 0 : i32
    return %c0_i32, %arg0 : i32, i32
  }
}

</mosaic_0001>

<llo_original>
// kernel: tpu_custom_call.1
$region0: #{tpu_custom_call.1}
  #allocation0 [shape = 'u32[]', space=smem, size = 0x4, offset = 0x4, fixed_abs, tag = 'smem constant byte address 0x4 - core index']
  #allocation1 [shape = 'u32[144,128]{1,0:T(1,128)}', space=vmem, size = 0x12000, scoped, tag = 'internal scratch']
  #allocation2 [shape = 'f32[1,1]{1,0:T(1,128)S(1)}', space=vmem, size = 0x200, scoped, tag = 'scoped memory for tpu_custom_call.1']
  %s0 = inlined_call_operand.vmem [shape: f32[20,8], index: 0, kind: input, shape index: {}]
  %s1 = inlined_call_operand.vmem [shape: f32[64,20], index: 1, kind: input, shape index: {}]
  %s2 = inlined_call_operand.vmem [shape: f32[64,1], index: 2, kind: input, shape index: {}]
  %s3 = inlined_call_operand.vmem [shape: f32[32,64], index: 3, kind: input, shape index: {}]
  %s4 = inlined_call_operand.vmem [shape: f32[32,1], index: 4, kind: input, shape index: {}]
  %s5 = inlined_call_operand.vmem [shape: f32[1,32], index: 5, kind: input, shape index: {}]
  %s6 = inlined_call_operand.<no memory space> [shape: f32[1,1], index: 6, kind: input, shape index: {}]
  %s7 = inlined_call_operand.hbm [shape: f32[1,8], index: 7, kind: output, shape index: {}]
  %s8 = sld [smem:[#allocation0]]
  $region38: #{tpu_custom_call.1} parent=0
    _
  %s10 = ssub.s32 1, %s8
  %s11 = scalar_select 0, %s10, %s8
  %v12 = vstv %s6
  %13 = vst [vmem:[#allocation2] sm:$0x1] %v12
  $region1: #{tpu_custom_call.1} parent=0
    #allocation3 [shape = 'u8[512]{0}', space=vmem, size = 0x400, scoped, tag = 'output window, operand 0, single buffered']
    #allocation4 [shape = 's32[1]{0}', space=sflag, size = 0x4, scoped, tag = 'scoped memory for tpu_custom_call.1']
    %14 = vsyncpa [#allocation4], 0
    // Predicated region
    $region2: #{tpu_custom_call.1} parent=1 // pred_check
      _
    $region3: #{tpu_custom_call.1} parent=1 // pred_check_branch
      %16 = sbr.rel (0) target = $region5
    $region4: #{tpu_custom_call.1} parent=1 // pred_region
      _
    $region5: #{tpu_custom_call.1} parent=1 // pred_fallthru
      _
    // Predicated region
    $region6: #{tpu_custom_call.1} parent=1 // pred_check
      _
    $region7: #{tpu_custom_call.1} parent=1 // pred_check_branch
      %18 = sbr.rel (0) target = $region9
    $region8: #{tpu_custom_call.1} parent=1 // pred_region
      _
    $region9: #{tpu_custom_call.1} parent=1 // pred_fallthru
      _
    // Predicated region
    $region10: #{tpu_custom_call.1} parent=1 // pred_check
      _
    $region11: #{tpu_custom_call.1} parent=1 // pred_check_branch
      %20 = sbr.rel (0) target = $region13
    $region12: #{tpu_custom_call.1} parent=1 // pred_region
      _
    $region13: #{tpu_custom_call.1} parent=1 // pred_fallthru
      _
    // Predicated region
    $region14: #{tpu_custom_call.1} parent=1 // pred_check
      _
    $region15: #{tpu_custom_call.1} parent=1 // pred_check_branch
      %22 = sbr.rel (0) target = $region17
    $region16: #{tpu_custom_call.1} parent=1 // pred_region
      _
    $region17: #{tpu_custom_call.1} parent=1 // pred_fallthru
      _
    // Predicated region
    $region18: #{tpu_custom_call.1} parent=1 // pred_check
      _
    $region19: #{tpu_custom_call.1} parent=1 // pred_check_branch
      %24 = sbr.rel (0) target = $region21
    $region20: #{tpu_custom_call.1} parent=1 // pred_region
      _
    $region21: #{tpu_custom_call.1} parent=1 // pred_fallthru
      _
    // Predicated region
    $region22: #{tpu_custom_call.1} parent=1 // pred_check
      _
    $region23: #{tpu_custom_call.1} parent=1 // pred_check_branch
      %26 = sbr.rel (0) target = $region25
    $region24: #{tpu_custom_call.1} parent=1 // pred_region
      _
    $region25: #{tpu_custom_call.1} parent=1 // pred_fallthru
      _
    // Predicated region
    $region26: #{tpu_custom_call.1} parent=1 // pred_check
      _
    $region27: #{tpu_custom_call.1} parent=1 // pred_check_branch
      %28 = sbr.rel (0) target = $region29
    $region28: #{tpu_custom_call.1} parent=1 // pred_region
      _
    $region29: #{tpu_custom_call.1} parent=1 // pred_fallthru
      _
    %v29 = vld [vmem:[%s1] sm:$0xff]
    %v30 = vld [vmem:[%s1 + $0x8] sm:$0xff]
    %v31 = vld [vmem:[%s1 + $0x10] sm:$0xff]
    %v32 = vld [vmem:[%s1 + $0x18] sm:$0xff]
    %v33 = vld [vmem:[%s1 + $0x20] sm:$0xff]
    %v34 = vld [vmem:[%s1 + $0x28] sm:$0xff]
    %v35 = vld [vmem:[%s1 + $0x30] sm:$0xff]
    %v36 = vld [vmem:[%s1 + $0x38] sm:$0xff]
    %v37 = vld [vmem:[%s0] sm:$0xff]
    %v38 = vld [vmem:[%s0 + $0x8] sm:$0xff]
    %v39 = vld [vmem:[%s0 + $0x10] sm:$0xf]
    %v40 = vld [vmem:[%s2] sm:$0xff]
    %v41 = vld [vmem:[%s2 + $0x8] sm:$0xff]
    %v42 = vld [vmem:[%s2 + $0x10] sm:$0xff]
    %v43 = vld [vmem:[%s2 + $0x18] sm:$0xff]
    %v44 = vld [vmem:[%s2 + $0x20] sm:$0xff]
    %v45 = vld [vmem:[%s2 + $0x28] sm:$0xff]
    %v46 = vld [vmem:[%s2 + $0x30] sm:$0xff]
    %v47 = vld [vmem:[%s2 + $0x38] sm:$0xff]
    %49 = vset.pattern.permute.xlu0 0
    %50 = vperm.xlu0 %49, %v40
    %v51 = vpop.permute.xlu0 %50
    %54 = vset.pattern.permute.xlu0 0
    %55 = vperm.xlu0 %54, %v41
    %v56 = vpop.permute.xlu0 %55
    %59 = vset.pattern.permute.xlu0 0
    %60 = vperm.xlu0 %59, %v42
    %v61 = vpop.permute.xlu0 %60
    %64 = vset.pattern.permute.xlu0 0
    %65 = vperm.xlu0 %64, %v43
    %v66 = vpop.permute.xlu0 %65
    %69 = vset.pattern.permute.xlu0 0
    %70 = vperm.xlu0 %69, %v44
    %v71 = vpop.permute.xlu0 %70
    %74 = vset.pattern.permute.xlu0 0
    %75 = vperm.xlu0 %74, %v45
    %v76 = vpop.permute.xlu0 %75
    %79 = vset.pattern.permute.xlu0 0
    %80 = vperm.xlu0 %79, %v46
    %v81 = vpop.permute.xlu0 %80
    %84 = vset.pattern.permute.xlu0 0
    %85 = vperm.xlu0 %84, %v47
    %v86 = vpop.permute.xlu0 %85
    %vm88 = vcmask 162816
    %v90 = vsel %vm88, %v29, 0
    %v93 = vsel %vm88, %v30, 0
    %v96 = vsel %vm88, %v31, 0
    %v99 = vsel %vm88, %v32, 0
    %v102 = vsel %vm88, %v33, 0
    %v105 = vsel %vm88, %v34, 0
    %v108 = vsel %vm88, %v35, 0
    %v111 = vsel %vm88, %v36, 0
    %vm113 = vcmask 1043456
    %v115 = vsel %vm113, %v39, 0
    %117 = vmatprep.subr.mxu0 0.0
    %118 = vmatpush1.msra.mxu0 0.0
    %119 = vmatprep.subr.mxu0 0.0
    %120 = vmatpush1.msra.mxu0 0.0
    %121 = vmatprep.subr.mxu0 0.0
    %122 = vmatpush1.msra.mxu0 0.0
    %123 = vmatprep.subr.mxu0 0.0
    %124 = vmatpush1.msra.mxu0 0.0
    %125 = vmatprep.subr.mxu0 0.0
    %126 = vmatpush1.msra.mxu0 0.0
    %127 = vmatprep.subr.mxu0 0.0
    %128 = vmatpush1.msra.mxu0 0.0
    %129 = vmatprep.subr.mxu0 0.0
    %130 = vmatpush1.msra.mxu0 0.0
    %131 = vmatprep.subr.mxu0 0.0
    %132 = vmatpush1.msra.mxu0 0.0
    %133 = vmatprep.subr.mxu0 0.0
    %134 = vmatpush1.msra.mxu0 0.0
    %135 = vmatprep.subr.mxu0 0.0
    %136 = vmatpush1.msra.mxu0 0.0
    %137 = vmatprep.subr.mxu0 0.0
    %138 = vmatpush1.msra.mxu0 0.0
    %139 = vmatprep.subr.mxu0 0.0
    %140 = vmatpush1.msra.mxu0 0.0
    %141 = vmatprep.subr.mxu0 0.0
    %142 = vmatpush1.msra.mxu0 0.0
    %143 = vmatprep.subr.mxu0 0.0
    %144 = vmatpush1.msra.mxu0 %v115
    %145 = vmatprep.subr.mxu0 0.0
    %146 = vmatpush1.msra.mxu0 %v38
    %147 = vmatprep.subr.mxu0 0.0
    %148 = vmatpush1.msra.mxu0 %v37
    %149 = vmatprep.subr.mxu0 0.0
    %150 = vmatpush2.msra.mxu0 0.0
    %151 = vmatprep.subr.mxu0 0.0
    %152 = vmatpush2.msra.mxu0 0.0
    %153 = vmatprep.subr.mxu0 0.0
    %154 = vmatpush2.msra.mxu0 0.0
    %155 = vmatprep.subr.mxu0 0.0
    %156 = vmatpush2.msra.mxu0 0.0
    %157 = vmatprep.subr.mxu0 0.0
    %158 = vmatpush2.msra.mxu0 0.0
    %159 = vmatprep.subr.mxu0 0.0
    %160 = vmatpush2.msra.mxu0 0.0
    %161 = vmatprep.subr.mxu0 0.0
    %162 = vmatpush2.msra.mxu0 0.0
    %163 = vmatprep.subr.mxu0 0.0
    %164 = vmatpush2.msra.mxu0 0.0
    %165 = vmatprep.subr.mxu0 0.0
    %166 = vmatpush2.msra.mxu0 0.0
    %167 = vmatprep.subr.mxu0 0.0
    %168 = vmatpush2.msra.mxu0 0.0
    %169 = vmatprep.subr.mxu0 0.0
    %170 = vmatpush2.msra.mxu0 0.0
    %171 = vmatprep.subr.mxu0 0.0
    %172 = vmatpush2.msra.mxu0 0.0
    %173 = vmatprep.subr.mxu0 0.0
    %174 = vmatpush2.msra.mxu0 0.0
    %175 = vmatprep.subr.mxu0 0.0
    %176 = vmatpush2.msra.mxu0 0.0
    %177 = vmatprep.subr.mxu0 0.0
    %178 = vmatpush2.msra.mxu0 0.0
    %179 = vmatprep.subr.mxu0 0.0
    %180 = vmatpush2.msra.mxu0 0.0
    %181 = vmatprep.mubr.f32.mxu0 0.0
    %182 = vmatmul.mubr.f32.gmra.mxu0 %v90
    %v183 = vpop.f32.mrf.mxu0
    %v184 = vadd.f32 %v51, %v183
    %v185 = vpop.f32.mrf.mxu0
    %186 = vmatprep.mubr.f32.mxu0 0.0
    %187 = vmatmul.mubr.f32.gmra.mxu0 %v93
    %v188 = vpop.f32.mrf.mxu0
    %v189 = vadd.f32 %v56, %v188
    %v190 = vpop.f32.mrf.mxu0
    %191 = vmatprep.mubr.f32.mxu0 0.0
    %192 = vmatmul.mubr.f32.gmra.mxu0 %v96
    %v193 = vpop.f32.mrf.mxu0
    %v194 = vadd.f32 %v61, %v193
    %v195 = vpop.f32.mrf.mxu0
    %196 = vmatprep.mubr.f32.mxu0 0.0
    %197 = vmatmul.mubr.f32.gmra.mxu0 %v99
    %v198 = vpop.f32.mrf.mxu0
    %v199 = vadd.f32 %v66, %v198
    %v200 = vpop.f32.mrf.mxu0
    %201 = vmatprep.mubr.f32.mxu0 0.0
    %202 = vmatmul.mubr.f32.gmra.mxu0 %v102
    %v203 = vpop.f32.mrf.mxu0
    %v204 = vadd.f32 %v71, %v203
    %v205 = vpop.f32.mrf.mxu0
    %206 = vmatprep.mubr.f32.mxu0 0.0
    %207 = vmatmul.mubr.f32.gmra.mxu0 %v105
    %v208 = vpop.f32.mrf.mxu0
    %v209 = vadd.f32 %v76, %v208
    %v210 = vpop.f32.mrf.mxu0
    %211 = vmatprep.mubr.f32.mxu0 0.0
    %212 = vmatmul.mubr.f32.gmra.mxu0 %v108
    %v213 = vpop.f32.mrf.mxu0
    %v214 = vadd.f32 %v81, %v213
    %v215 = vpop.f32.mrf.mxu0
    %216 = vmatprep.mubr.f32.mxu0 0.0
    %217 = vmatmul.mubr.f32.gmra.mxu0 %v111
    %v218 = vpop.f32.mrf.mxu0
    %v219 = vadd.f32 %v86, %v218
    %v220 = vpop.f32.mrf.mxu0
    %221 = vdwg.mxu0
    %vm222 = vcmp.ge.f32.partialorder %v184, 0.0
    %vm223 = vcmp.ge.f32.partialorder %v189, 0.0
    %vm224 = vcmp.ge.f32.partialorder %v194, 0.0
    %vm225 = vcmp.ge.f32.partialorder %v199, 0.0
    %vm226 = vcmp.ge.f32.partialorder %v204, 0.0
    %vm227 = vcmp.ge.f32.partialorder %v209, 0.0
    %vm228 = vcmp.ge.f32.partialorder %v214, 0.0
    %vm229 = vcmp.ge.f32.partialorder %v219, 0.0
    %v230 = vmul.f32 %v184, 0.01
    %v231 = vmul.f32 %v189, 0.01
    %v232 = vmul.f32 %v194, 0.01
    %v233 = vmul.f32 %v199, 0.01
    %v234 = vmul.f32 %v204, 0.01
    %v235 = vmul.f32 %v209, 0.01
    %v236 = vmul.f32 %v214, 0.01
    %v237 = vmul.f32 %v219, 0.01
    %v238 = vsel %vm222, %v184, %v230
    %v239 = vsel %vm223, %v189, %v231
    %v240 = vsel %vm224, %v194, %v232
    %v241 = vsel %vm225, %v199, %v233
    %v242 = vsel %vm226, %v204, %v234
    %v243 = vsel %vm227, %v209, %v235
    %v244 = vsel %vm228, %v214, %v236
    %v245 = vsel %vm229, %v219, %v237
    %v246 = vld [vmem:[%s3] sm:$0xff]
    %v247 = vld [vmem:[%s3 + $0x8] sm:$0xff]
    %v248 = vld [vmem:[%s3 + $0x10] sm:$0xff]
    %v249 = vld [vmem:[%s3 + $0x18] sm:$0xff]
    %v250 = vld [vmem:[%s4] sm:$0xff]
    %v251 = vld [vmem:[%s4 + $0x8] sm:$0xff]
    %v252 = vld [vmem:[%s4 + $0x10] sm:$0xff]
    %v253 = vld [vmem:[%s4 + $0x18] sm:$0xff]
    %255 = vset.pattern.permute.xlu0 0
    %256 = vperm.xlu0 %255, %v250
    %v257 = vpop.permute.xlu0 %256
    %260 = vset.pattern.permute.xlu0 0
    %261 = vperm.xlu0 %260, %v251
    %v262 = vpop.permute.xlu0 %261
    %265 = vset.pattern.permute.xlu0 0
    %266 = vperm.xlu0 %265, %v252
    %v267 = vpop.permute.xlu0 %266
    %270 = vset.pattern.permute.xlu0 0
    %271 = vperm.xlu0 %270, %v253
    %v272 = vpop.permute.xlu0 %271
    %vm274 = vcmask 523264
    %v276 = vsel %vm274, %v246, 0
    %v279 = vsel %vm274, %v247, 0
    %v282 = vsel %vm274, %v248, 0
    %v285 = vsel %vm274, %v249, 0
    %287 = vmatprep.subr.mxu0 0.0
    %288 = vmatpush1.msra.mxu0 0.0
    %289 = vmatprep.subr.mxu0 0.0
    %290 = vmatpush1.msra.mxu0 0.0
    %291 = vmatprep.subr.mxu0 0.0
    %292 = vmatpush1.msra.mxu0 0.0
    %293 = vmatprep.subr.mxu0 0.0
    %294 = vmatpush1.msra.mxu0 0.0
    %295 = vmatprep.subr.mxu0 0.0
    %296 = vmatpush1.msra.mxu0 0.0
    %297 = vmatprep.subr.mxu0 0.0
    %298 = vmatpush1.msra.mxu0 0.0
    %299 = vmatprep.subr.mxu0 0.0
    %300 = vmatpush1.msra.mxu0 0.0
    %301 = vmatprep.subr.mxu0 0.0
    %302 = vmatpush1.msra.mxu0 0.0
    %303 = vmatprep.subr.mxu0 0.0
    %304 = vmatpush1.msra.mxu0 %v245
    %305 = vmatprep.subr.mxu0 0.0
    %306 = vmatpush1.msra.mxu0 %v244
    %307 = vmatprep.subr.mxu0 0.0
    %308 = vmatpush1.msra.mxu0 %v243
    %309 = vmatprep.subr.mxu0 0.0
    %310 = vmatpush1.msra.mxu0 %v242
    %311 = vmatprep.subr.mxu0 0.0
    %312 = vmatpush1.msra.mxu0 %v241
    %313 = vmatprep.subr.mxu0 0.0
    %314 = vmatpush1.msra.mxu0 %v240
    %315 = vmatprep.subr.mxu0 0.0
    %316 = vmatpush1.msra.mxu0 %v239
    %317 = vmatprep.subr.mxu0 0.0
    %318 = vmatpush1.msra.mxu0 %v238
    %319 = vmatprep.subr.mxu0 0.0
    %320 = vmatpush2.msra.mxu0 0.0
    %321 = vmatprep.subr.mxu0 0.0
    %322 = vmatpush2.msra.mxu0 0.0
    %323 = vmatprep.subr.mxu0 0.0
    %324 = vmatpush2.msra.mxu0 0.0
    %325 = vmatprep.subr.mxu0 0.0
    %326 = vmatpush2.msra.mxu0 0.0
    %327 = vmatprep.subr.mxu0 0.0
    %328 = vmatpush2.msra.mxu0 0.0
    %329 = vmatprep.subr.mxu0 0.0
    %330 = vmatpush2.msra.mxu0 0.0
    %331 = vmatprep.subr.mxu0 0.0
    %332 = vmatpush2.msra.mxu0 0.0
    %333 = vmatprep.subr.mxu0 0.0
    %334 = vmatpush2.msra.mxu0 0.0
    %335 = vmatprep.subr.mxu0 0.0
    %336 = vmatpush2.msra.mxu0 0.0
    %337 = vmatprep.subr.mxu0 0.0
    %338 = vmatpush2.msra.mxu0 0.0
    %339 = vmatprep.subr.mxu0 0.0
    %340 = vmatpush2.msra.mxu0 0.0
    %341 = vmatprep.subr.mxu0 0.0
    %342 = vmatpush2.msra.mxu0 0.0
    %343 = vmatprep.subr.mxu0 0.0
    %344 = vmatpush2.msra.mxu0 0.0
    %345 = vmatprep.subr.mxu0 0.0
    %346 = vmatpush2.msra.mxu0 0.0
    %347 = vmatprep.subr.mxu0 0.0
    %348 = vmatpush2.msra.mxu0 0.0
    %349 = vmatprep.subr.mxu0 0.0
    %350 = vmatpush2.msra.mxu0 0.0
    %351 = vmatprep.mubr.f32.mxu0 0.0
    %352 = vmatmul.mubr.f32.gmra.mxu0 %v276
    %v353 = vpop.f32.mrf.mxu0
    %v354 = vadd.f32 %v257, %v353
    %v355 = vpop.f32.mrf.mxu0
    %356 = vmatprep.mubr.f32.mxu0 0.0
    %357 = vmatmul.mubr.f32.gmra.mxu0 %v279
    %v358 = vpop.f32.mrf.mxu0
    %v359 = vadd.f32 %v262, %v358
    %v360 = vpop.f32.mrf.mxu0
    %361 = vmatprep.mubr.f32.mxu0 0.0
    %362 = vmatmul.mubr.f32.gmra.mxu0 %v282
    %v363 = vpop.f32.mrf.mxu0
    %v364 = vadd.f32 %v267, %v363
    %v365 = vpop.f32.mrf.mxu0
    %366 = vmatprep.mubr.f32.mxu0 0.0
    %367 = vmatmul.mubr.f32.gmra.mxu0 %v285
    %v368 = vpop.f32.mrf.mxu0
    %v369 = vadd.f32 %v272, %v368
    %v370 = vpop.f32.mrf.mxu0
    %371 = vdwg.mxu0
    %vm372 = vcmp.ge.f32.partialorder %v354, 0.0
    %vm373 = vcmp.ge.f32.partialorder %v359, 0.0
    %vm374 = vcmp.ge.f32.partialorder %v364, 0.0
    %vm375 = vcmp.ge.f32.partialorder %v369, 0.0
    %v376 = vmul.f32 %v354, 0.01
    %v377 = vmul.f32 %v359, 0.01
    %v378 = vmul.f32 %v364, 0.01
    %v379 = vmul.f32 %v369, 0.01
    %v380 = vsel %vm372, %v354, %v376
    %v381 = vsel %vm373, %v359, %v377
    %v382 = vsel %vm374, %v364, %v378
    %v383 = vsel %vm375, %v369, %v379
    %v384 = vld [vmem:[%s5] sm:$0x1]
    %v385 = vld [vmem:[#allocation2] sm:$0x1]
    %387 = vset.pattern.permute.xlu0 0
    %388 = vperm.xlu0 %387, %v385
    %v389 = vpop.permute.xlu0 %388
    %v391 = vlaneseq
    %v392 = vshrl.u32 %v391, 7
    %v393 = vsub.s32 0, %v392
    %v394 = vrot.slane %v389, %v393
    %vm395 = vcmask 261120
    %v397 = vsel %vm395, %v384, 0
    %399 = vmatprep.subr.mxu0 0.0
    %400 = vmatpush1.msra.mxu0 0.0
    %401 = vmatprep.subr.mxu0 0.0
    %402 = vmatpush1.msra.mxu0 0.0
    %403 = vmatprep.subr.mxu0 0.0
    %404 = vmatpush1.msra.mxu0 0.0
    %405 = vmatprep.subr.mxu0 0.0
    %406 = vmatpush1.msra.mxu0 0.0
    %407 = vmatprep.subr.mxu0 0.0
    %408 = vmatpush1.msra.mxu0 0.0
    %409 = vmatprep.subr.mxu0 0.0
    %410 = vmatpush1.msra.mxu0 0.0
    %411 = vmatprep.subr.mxu0 0.0
    %412 = vmatpush1.msra.mxu0 0.0
    %413 = vmatprep.subr.mxu0 0.0
    %414 = vmatpush1.msra.mxu0 0.0
    %415 = vmatprep.subr.mxu0 0.0
    %416 = vmatpush1.msra.mxu0 0.0
    %417 = vmatprep.subr.mxu0 0.0
    %418 = vmatpush1.msra.mxu0 0.0
    %419 = vmatprep.subr.mxu0 0.0
    %420 = vmatpush1.msra.mxu0 0.0
    %421 = vmatprep.subr.mxu0 0.0
    %422 = vmatpush1.msra.mxu0 0.0
    %423 = vmatprep.subr.mxu0 0.0
    %424 = vmatpush1.msra.mxu0 %v383
    %425 = vmatprep.subr.mxu0 0.0
    %426 = vmatpush1.msra.mxu0 %v382
    %427 = vmatprep.subr.mxu0 0.0
    %428 = vmatpush1.msra.mxu0 %v381
    %429 = vmatprep.subr.mxu0 0.0
    %430 = vmatpush1.msra.mxu0 %v380
    %431 = vmatprep.subr.mxu0 0.0
    %432 = vmatpush2.msra.mxu0 0.0
    %433 = vmatprep.subr.mxu0 0.0
    %434 = vmatpush2.msra.mxu0 0.0
    %435 = vmatprep.subr.mxu0 0.0
    %436 = vmatpush2.msra.mxu0 0.0
    %437 = vmatprep.subr.mxu0 0.0
    %438 = vmatpush2.msra.mxu0 0.0
    %439 = vmatprep.subr.mxu0 0.0
    %440 = vmatpush2.msra.mxu0 0.0
    %441 = vmatprep.subr.mxu0 0.0
    %442 = vmatpush2.msra.mxu0 0.0
    %443 = vmatprep.subr.mxu0 0.0
    %444 = vmatpush2.msra.mxu0 0.0
    %445 = vmatprep.subr.mxu0 0.0
    %446 = vmatpush2.msra.mxu0 0.0
    %447 = vmatprep.subr.mxu0 0.0
    %448 = vmatpush2.msra.mxu0 0.0
    %449 = vmatprep.subr.mxu0 0.0
    %450 = vmatpush2.msra.mxu0 0.0
    %451 = vmatprep.subr.mxu0 0.0
    %452 = vmatpush2.msra.mxu0 0.0
    %453 = vmatprep.subr.mxu0 0.0
    %454 = vmatpush2.msra.mxu0 0.0
    %455 = vmatprep.subr.mxu0 0.0
    %456 = vmatpush2.msra.mxu0 0.0
    %457 = vmatprep.subr.mxu0 0.0
    %458 = vmatpush2.msra.mxu0 0.0
    %459 = vmatprep.subr.mxu0 0.0
    %460 = vmatpush2.msra.mxu0 0.0
    %461 = vmatprep.subr.mxu0 0.0
    %462 = vmatpush2.msra.mxu0 0.0
    %463 = vmatprep.mubr.f32.mxu0 0.0
    %464 = vmatmul.mubr.f32.gmra.mxu0 %v397
    %v465 = vpop.f32.mrf.mxu0
    %v466 = vadd.f32 %v394, %v465
    %v467 = vpop.f32.mrf.mxu0
    %468 = vdwg.mxu0
    %vm469 = vcmask 57344
    %470 = vst.msk [vmem:[#allocation3] sm:$0x1] %vm469, %v466
    // Predicated region
    $region30: #{tpu_custom_call.1} parent=1 // pred_check
      _
    $region31: #{tpu_custom_call.1} parent=1 // pred_check_branch
      %472 = sbr.rel (0) target = $region33
    $region32: #{tpu_custom_call.1} parent=1 // pred_region
      %s474 = ssub.s32 16, 16
      %475 = vsyncadd [#allocation4], %s474
      %s477 = sshll.u32 [#allocation3], 4
      %s478 = int_to_ptr.vmem [resolvable:$true] %s477
      %480 = dma.vmem_to_hbm [thread:$0]  %s478, 16, %s7, [#allocation4]
    $region33: #{tpu_custom_call.1} parent=1 // pred_fallthru
      _
    // Predicated region
    $region34: #{tpu_custom_call.1} parent=1 // pred_check
      _
    $region35: #{tpu_custom_call.1} parent=1 // pred_check_branch
      %482 = sbr.rel (0) target = $region37
    $region36: #{tpu_custom_call.1} parent=1 // pred_region
      %483 = dma.done [#allocation4], 16
    $region37: #{tpu_custom_call.1} parent=1 // pred_fallthru
      _
    %484 = vsyncpa [#allocation4], 1

</llo_original>
